<compile_context>
chip_gen: v7x
topology: tpu7x:2x2x1
jax: 0.10.0
libtpu: 0.0.40
codegen_flags: <defaults>
</compile_context>

<pallas_src>
import functools

import jax
import jax.numpy as jnp
from jax import lax
from jax.experimental import pallas as pl
from jax.experimental.pallas import tpu as pltpu

NLEV = 3.0  # 2-bit unsigned activation -> quant levels {0, 1, 2, 3}


# ----------------------------------------------------------------------------
# Parameter-prep glue (deterministic weight fake-quant, BN folding) — plain JAX
# ----------------------------------------------------------------------------
def lsq_fake_quant_weight(w, bit_width=2):
    # TODO(synk): exact brevitas LSQ_weight_quant_2bits semantics (learned per-tensor
    # scale + STE gradient) are not reproduced; scale uses the LSQ init rule.
    qmax = 2 ** (bit_width - 1) - 1   # 1
    qmin = -(2 ** (bit_width - 1))    # -2
    scale = 2.0 * jnp.mean(jnp.abs(w)) / jnp.sqrt(float(qmax)) + 1e-8
    return jnp.clip(jnp.round(w / scale), qmin, qmax) * scale


def fold_bn(gamma, beta, mean, var, eps=1e-5):
    # Inference-mode BatchNorm folded to per-channel scale/bias.
    # TODO(synk): PyTorch BN in train mode would use batch statistics.
    scale = gamma / jnp.sqrt(var + eps)
    bias = beta - mean * scale
    return scale, bias


# ----------------------------------------------------------------------------
# Tiling heuristics
# ----------------------------------------------------------------------------
def _lane_pack_factor(n, wc_in, max_lanes=128):
    """Largest power-of-2 P dividing n with P * (W*Cin) <= 128 lanes."""
    p = 1
    while n % (2 * p) == 0 and 2 * p * wc_in <= max_lanes:
        p *= 2
    return p


def _pick_block_batch(n_pk, h, target_rows=256):
    """Packed images per grid block: divisor of n_pk, block rows a multiple of 16
    (or the whole array), rows <= target, and keep >=2 grid steps when the batch
    allows it (feeds both v7x TensorCores / megacore)."""
    cap = max(1, target_rows // h)
    if n_pk >= 2:
        cap = max(1, min(cap, n_pk // 2))
    divs = [d for d in range(1, n_pk + 1) if n_pk % d == 0]
    valid = [d for d in divs if (d * h) % 16 == 0 or d == n_pk]
    under = [d for d in valid if d <= cap]
    return max(under) if under else min(valid)


def _pick_chunk(b, h, wc_max, acc_budget_bytes=64 * 1024):
    """Images per in-kernel dw chunk so the f32 accumulator stays ~<=16 vregs."""
    bc = max(1, acc_budget_bytes // (4 * h * max(1, wc_max)))
    bc = min(bc, b)
    while b % bc:
        bc -= 1
    return bc


def _const_spec(shape):
    """BlockSpec for an operand that is identical at every grid step: constant
    index map + single buffering (no pointless double-buffer of broadcast weights)."""
    return pl.BlockSpec(shape, lambda *_: (0,) * len(shape),
                        pipeline_mode=pl.Buffered(1))


# ----------------------------------------------------------------------------
# Fused kernel, lane-packed layout (stride == 1, small W*C):
#   block = (B*h, P*W*Cin) f32 slab; P images packed along lanes, B packed images
#   batched along rows.  BN scale folded into wdw/wpw; dw dequant folded into the
#   block-diagonal pw weight, so the intermediate carries integer levels 0..3.
# ----------------------------------------------------------------------------
def _fused_dws_packed_kernel(x_ref, wdw_ref, bdw_ref, wpw_ref, bpw_ref,
                             scal_ref, o_ref, *, h, cin, wc_img, bc, nchunks):
    rows_c = bc * h
    wcp_in = x_ref.shape[1]

    a_dw = scal_ref[0]
    inv_dw = scal_ref[1]
    a_pw = scal_ref[2]
    inv_pw = scal_ref[3]
    st_pw = scal_ref[4]

    wdw = wdw_ref[...]                 # (3, 3, wcp_in) f32, BN-folded, lane-tiled
    bdw = bdw_ref[0, :]
    wpw = wpw_ref[...]                 # (wcp_in, wcp_out) bf16, block-diag, dequant folded
    bpw = bpw_ref[0, :]

    # image-local coordinates (masks handle batch- and lane-packing boundaries)
    row = lax.broadcasted_iota(jnp.int32, (rows_c, wcp_in), 0) % h
    lane = lax.broadcasted_iota(jnp.int32, (rows_c, wcp_in), 1) % wc_img
    row_mask = {0: row >= 1, 2: row < h - 1}             # kh -> rows with a valid tap
    lane_mask = {0: lane >= cin, 2: lane < wc_img - cin}  # kw -> lanes with a valid tap

    # Chunk over whole images: each chunk ends in an o_ref store, so the f32
    # accumulator live range stays bounded (no register-file blowout / spills).
    for c in range(nchunks):
        x = x_ref[c * rows_c:(c + 1) * rows_c, :].astype(jnp.float32)
        acc = jnp.zeros((rows_c, wcp_in), jnp.float32)
        for kh in range(3):
            dh = kh - 1
            if dh == 0:
                xr = x
            else:
                # row roll hoisted out of the kw loop (halo generated in-kernel)
                xr = pltpu.roll(x, shift=(-dh) % rows_c, axis=0)
                xr = jnp.where(row_mask[kh], xr, 0.0)
            for kw in range(3):
                dwo = kw - 1
                if dwo == 0:
                    tap = xr
                else:
                    tap = pltpu.roll(xr, shift=(-dwo * cin) % wcp_in, axis=1)
                    tap = jnp.where(lane_mask[kw], tap, 0.0)
                acc = acc + tap * wdw[kh, kw, :]

        # dw epilogue: folded-BN bias + PACT clip + 2-bit quant -> integer levels 0..3
        yq = jnp.round(jnp.clip(acc + bdw, 0.0, a_dw) * inv_dw)

        # pointwise 1x1 as one MXU matmul; bf16 operands (yq levels are bf16-exact),
        # f32 accumulate.  Output store is a full-lane slab.
        z = jnp.dot(yq.astype(jnp.bfloat16), wpw,
                    preferred_element_type=jnp.float32)
        z = z + bpw
        z = jnp.round(jnp.clip(z, 0.0, a_pw) * inv_pw) * st_pw
        o_ref[c * rows_c:(c + 1) * rows_c, :] = z.astype(o_ref.dtype)


# ----------------------------------------------------------------------------
# Fused kernel, general layout (any stride / large channel counts).
# Channels ride the 128-lane axis; one padded image per grid step.
# ----------------------------------------------------------------------------
def _fused_dws_general_kernel(x_ref, wdw_ref, bdw_ref, wpw_ref, bpw_ref,
                              scal_ref, o_ref, *, hout, wout, stride):
    xp = x_ref[0].astype(jnp.float32)        # (hp, wp, cin), zero-padded
    wdw = wdw_ref[...]
    a_dw = scal_ref[0]
    inv_dw = scal_ref[1]
    a_pw = scal_ref[2]
    inv_pw = scal_ref[3]
    st_pw = scal_ref[4]

    cin = xp.shape[-1]
    acc = jnp.zeros((hout, wout, cin), jnp.float32)
    # TODO(synk): for stride > 1 these strided slices force sublane relayouts; an
    # in-kernel roll+mask halo (as in the packed path) + subsample, plus H-tiling
    # with halo-overlapped blocks, is the proper rework for large late-stage shapes.
    for kh in range(3):
        for kw in range(3):
            tap = xp[kh:kh + (hout - 1) * stride + 1:stride,
                     kw:kw + (wout - 1) * stride + 1:stride, :]
            acc = acc + tap * wdw[kh, kw, :]

    yq = jnp.round(jnp.clip(acc + bdw_ref[0, :], 0.0, a_dw) * inv_dw)
    z = jnp.dot(yq.reshape(hout * wout, cin).astype(jnp.bfloat16), wpw_ref[...],
                preferred_element_type=jnp.float32)
    z = z + bpw_ref[0, :]
    z = jnp.round(jnp.clip(z, 0.0, a_pw) * inv_pw) * st_pw
    o_ref[0] = z.reshape(hout, wout, -1).astype(o_ref.dtype)


# ----------------------------------------------------------------------------
# DwsConvBlock forward
# ----------------------------------------------------------------------------
def dws_conv_block(x_nchw, params, stride=1, out_dtype=jnp.bfloat16):
    # Output is bf16 by default: the PACT-quantized activation takes only 4 distinct
    # levels * scale, so bf16 storage is (effectively) lossless and halves HBM writes.
    n, cin, h, w = x_nchw.shape

    # ---- parameter prep: fake-quant weights, fold BN scale, quant constants ----
    wdw_q = lsq_fake_quant_weight(params["dw_w"])                  # (3, 3, cin)
    sc_dw, bs_dw = fold_bn(params["dw_gamma"], params["dw_beta"],
                           params["dw_mean"], params["dw_var"])
    wdw_f = (wdw_q * sc_dw).astype(jnp.float32)                    # BN scale folded in

    wpw_q = lsq_fake_quant_weight(params["pw_w"])                  # (cin, cout)
    sc_pw, bs_pw = fold_bn(params["pw_gamma"], params["pw_beta"],
                           params["pw_mean"], params["pw_var"])
    wpw_f = wpw_q * sc_pw[None, :]
    cout = wpw_f.shape[1]

    a_dw = jnp.asarray(params["dw_alpha"], jnp.float32)
    a_pw = jnp.asarray(params["pw_alpha"], jnp.float32)
    st_dw = a_dw / NLEV
    wpw_fold = (st_dw * wpw_f).astype(jnp.float32)                 # dw dequant folded in
    scal = jnp.stack([a_dw, NLEV / a_dw, a_pw, NLEV / a_pw, a_pw / NLEV]
                     ).astype(jnp.float32)                         # SMEM scalars

    hout = (h + 2 - 3) // stride + 1
    wout = (w + 2 - 3) // stride + 1
    wc_in, wc_out = w * cin, w * cout
    out_itemsize = jnp.dtype(out_dtype).itemsize

    # ---- packed-path feasibility (tight guard: actual packed widths / block bytes) ----
    p = _lane_pack_factor(n, wc_in)
    wcp_in, wcp_out = p * wc_in, p * wc_out
    n_pk = n // p
    bimg = _pick_block_batch(n_pk, h)
    use_packed = (stride == 1 and cin < 128
                  and wcp_in <= 1024 and wcp_out <= 1024
                  and bimg * h * (wcp_in + wcp_out) * 4 <= 8 * 2**20)

    if use_packed:
        # ------------------ lane-packed fused path ------------------
        rows_blk = bimg * h
        grid = (n_pk // bimg,)
        bc = _pick_chunk(bimg, h, max(wcp_in, wcp_out))
        nchunks = bimg // bc

        # One fused transpose: NCHW -> (packed image, row, [image-in-pack, col, chan]).
        # TODO(synk): in a full MobileNet keep activations in this packed layout (and
        # in bf16) end-to-end and transpose only at the model boundary.
        x_pk = (x_nchw.reshape(n_pk, p, cin, h, w)
                      .transpose(0, 3, 1, 4, 2)
                      .reshape(n_pk * h, wcp_in))

        wdw_t = jnp.tile(wdw_f, (1, 1, p * w))                     # (3, 3, wcp_in)
        bdw_t = jnp.tile(bs_dw, p * w).reshape(1, wcp_in).astype(jnp.float32)
        # pointwise weights as block-diagonal (wcp_in, wcp_out), bf16 for the MXU.
        wpw_big = jnp.kron(jnp.eye(p * w, dtype=jnp.float32),
                           wpw_fold).astype(jnp.bfloat16)
        bpw_t = jnp.tile(bs_pw, p * w).reshape(1, wcp_out).astype(jnp.float32)

        # Actual MXU work of the block-diagonal matmul + VPU depthwise FMAs.
        flops = 2 * n_pk * h * wcp_in * wcp_out + 2 * 9 * n * h * w * cin
        bytes_accessed = (int(x_pk.size) * int(x_pk.dtype.itemsize)
                          + n_pk * h * wcp_out * out_itemsize
                          + int(wdw_t.size) * 4 + int(wpw_big.size) * 2
                          + (wcp_in + wcp_out) * 4)

        kern = functools.partial(_fused_dws_packed_kernel, h=h, cin=cin,
                                 wc_img=wc_in, bc=bc, nchunks=nchunks)
        out = pl.pallas_call(
            kern,
            out_shape=jax.ShapeDtypeStruct((n_pk * h, wcp_out), out_dtype),
            grid=grid,
            in_specs=[
                pl.BlockSpec((rows_blk, wcp_in), lambda i: (i, 0)),
                _const_spec((3, 3, wcp_in)),
                _const_spec((1, wcp_in)),
                _const_spec((wcp_in, wcp_out)),
                _const_spec((1, wcp_out)),
                pl.BlockSpec(memory_space=pltpu.MemorySpace.SMEM),
            ],
            out_specs=pl.BlockSpec((rows_blk, wcp_out), lambda i: (i, 0)),
            compiler_params=pltpu.CompilerParams(
                dimension_semantics=("parallel",),
                vmem_limit_bytes=32 * 1024 * 1024),
            cost_estimate=pl.CostEstimate(flops=int(flops), transcendentals=0,
                                          bytes_accessed=int(bytes_accessed)),
        )(x_pk, wdw_t, bdw_t, wpw_big, bpw_t, scal)

        y = (out.reshape(n_pk, h, p, w, cout)
                .transpose(0, 2, 4, 1, 3)
                .reshape(n, cout, hout, wout))                     # already NCHW
        return y

    # -------- general fused path (stride != 1 or large channel count) --------
    # TODO(synk): generate the halo in-kernel (roll+mask) instead of the jnp.pad HBM
    # pass, and tile H (halo-overlapped blocks) so very large images fit scoped VMEM.
    x_nhwc = jnp.transpose(x_nchw, (0, 2, 3, 1))
    x_pad = jnp.pad(x_nhwc, ((0, 0), (1, 1), (1, 1), (0, 0)))
    hp, wp = h + 2, w + 2
    wpw_g = wpw_fold.astype(jnp.bfloat16)

    blk_bytes = (2 * hp * wp * cin * int(x_pad.dtype.itemsize)
                 + 2 * hout * wout * cout * out_itemsize
                 + hout * wout * cin * 4
                 + cin * cout * 2)
    vmem_cap = int(min(64 * 2**20, max(32 * 2**20, 2 * blk_bytes)))

    kern = functools.partial(_fused_dws_general_kernel, hout=hout, wout=wout,
                             stride=stride)
    y = pl.pallas_call(
        kern,
        out_shape=jax.ShapeDtypeStruct((n, hout, wout, cout), out_dtype),
        grid=(n,),
        in_specs=[
            pl.BlockSpec((1, hp, wp, cin), lambda i: (i, 0, 0, 0)),
            _const_spec((3, 3, cin)),
            _const_spec((1, cin)),
            _const_spec((cin, cout)),
            _const_spec((1, cout)),
            pl.BlockSpec(memory_space=pltpu.MemorySpace.SMEM),
        ],
        out_specs=pl.BlockSpec((1, hout, wout, cout), lambda i: (i, 0, 0, 0)),
        compiler_params=pltpu.CompilerParams(dimension_semantics=("parallel",),
                                             vmem_limit_bytes=vmem_cap),
    )(x_pad, wdw_f, bs_dw.reshape(1, cin).astype(jnp.float32), wpw_g,
      bs_pw.reshape(1, cout).astype(jnp.float32), scal)

    return jnp.transpose(y, (0, 3, 1, 2))                          # NHWC -> NCHW


if __name__ == "__main__":
    key = jax.random.PRNGKey(0)
    keys = jax.random.split(key, 12)
    N, Cin, H, W = 2, 4, 16, 16
    Cout = 8
    stride = 1

    x = jax.random.normal(keys[0], (N, Cin, H, W), jnp.float32)

    params = dict(
        # depthwise conv weight, torch layout (Cin,1,3,3) stored here as (3,3,Cin)
        dw_w=0.2 * jax.random.normal(keys[1], (3, 3, Cin), jnp.float32),
        dw_gamma=1.0 + 0.1 * jax.random.normal(keys[2], (Cin,), jnp.float32),
        dw_beta=0.1 * jax.random.normal(keys[3], (Cin,), jnp.float32),
        dw_mean=0.05 * jax.random.normal(keys[4], (Cin,), jnp.float32),
        dw_var=1.0 + 0.1 * jax.random.uniform(keys[5], (Cin,), jnp.float32),
        dw_alpha=jnp.float32(6.0),   # PACT clipping threshold (learned scalar)
        # pointwise conv weight, torch layout (Cout,Cin,1,1) stored as (Cin,Cout)
        pw_w=0.2 * jax.random.normal(keys[6], (Cin, Cout), jnp.float32),
        pw_gamma=1.0 + 0.1 * jax.random.normal(keys[7], (Cout,), jnp.float32),
        pw_beta=0.1 * jax.random.normal(keys[8], (Cout,), jnp.float32),
        pw_mean=0.05 * jax.random.normal(keys[9], (Cout,), jnp.float32),
        pw_var=1.0 + 0.1 * jax.random.uniform(keys[10], (Cout,), jnp.float32),
        pw_alpha=jnp.float32(6.0),
    )

    y = dws_conv_block(x, params, stride=stride)
    jax.block_until_ready(y)
    assert y.shape == (N, Cout, H // stride, W // stride), y.shape
    assert y.dtype == jnp.bfloat16, y.dtype
    print("KERNEL_OK")
</pallas_src>

<mosaic_0001>
module attributes {stable_mosaic.version = 11 : i64} {
  func.func @_fused_dws_packed_kernel(%arg0: i32, %arg1: memref<16x128xf32, #tpu.memory_space<vmem>>, %arg2: memref<3x3x128xf32, #tpu.memory_space<vmem>>, %arg3: memref<1x128xf32, #tpu.memory_space<vmem>>, %arg4: memref<128x256xbf16, #tpu.memory_space<vmem>>, %arg5: memref<1x256xf32, #tpu.memory_space<vmem>>, %arg6: memref<5xf32, #tpu.memory_space<smem>>, %arg7: memref<16x256xbf16, #tpu.memory_space<vmem>>) attributes {dimension_semantics = [#tpu.dimension_semantics<parallel>], iteration_bounds = array<i64: 1>, scalar_prefetch = 0 : i64, scratch_operands = 0 : i64, tpu.core_type = #tpu.core_type<tc>, window_params = [{transform_indices = @transform_0, window_bounds = array<i64: 16, 128>}, {pipeline_mode = #tpu.pipeline_mode<synchronous>, transform_indices = @transform_1, window_bounds = array<i64: 3, 3, 128>}, {pipeline_mode = #tpu.pipeline_mode<synchronous>, transform_indices = @transform_2, window_bounds = array<i64: 1, 128>}, {pipeline_mode = #tpu.pipeline_mode<synchronous>, transform_indices = @transform_3, window_bounds = array<i64: 128, 256>}, {pipeline_mode = #tpu.pipeline_mode<synchronous>, transform_indices = @transform_4, window_bounds = array<i64: 1, 256>}, {transform_indices = @transform_5, window_bounds = array<i64: 5>}, {transform_indices = @transform_6, window_bounds = array<i64: 16, 256>}]} {
    %c0 = arith.constant 0 : index
    %0 = memref.load %arg6[%c0] : memref<5xf32, #tpu.memory_space<smem>>
    %c1 = arith.constant 1 : index
    %1 = memref.load %arg6[%c1] : memref<5xf32, #tpu.memory_space<smem>>
    %c2 = arith.constant 2 : index
    %2 = memref.load %arg6[%c2] : memref<5xf32, #tpu.memory_space<smem>>
    %c3 = arith.constant 3 : index
    %3 = memref.load %arg6[%c3] : memref<5xf32, #tpu.memory_space<smem>>
    %c4 = arith.constant 4 : index
    %4 = memref.load %arg6[%c4] : memref<5xf32, #tpu.memory_space<smem>>
    %c0_0 = arith.constant 0 : index
    %c0_1 = arith.constant 0 : index
    %c0_2 = arith.constant 0 : index
    %5 = vector.load %arg2[%c0_0, %c0_1, %c0_2] : memref<3x3x128xf32, #tpu.memory_space<vmem>>, vector<3x3x128xf32>
    %c0_3 = arith.constant 0 : index
    %c0_4 = arith.constant 0 : index
    %6 = vector.load %arg3[%c0_3, %c0_4] : memref<1x128xf32, #tpu.memory_space<vmem>>, vector<1x128xf32>
    %7 = vector.shape_cast %6 : vector<1x128xf32> to vector<128xf32>
    %c0_5 = arith.constant 0 : index
    %c0_6 = arith.constant 0 : index
    %8 = vector.load %arg4[%c0_5, %c0_6] : memref<128x256xbf16, #tpu.memory_space<vmem>>, vector<128x256xbf16>
    %c0_7 = arith.constant 0 : index
    %c0_8 = arith.constant 0 : index
    %9 = vector.load %arg5[%c0_7, %c0_8] : memref<1x256xf32, #tpu.memory_space<vmem>>, vector<1x256xf32>
    %10 = vector.shape_cast %9 : vector<1x256xf32> to vector<256xf32>
    %11 = tpu.iota {dimensions = array<i32: 0>} : vector<16x128xi32>
    %c16_i32 = arith.constant 16 : i32
    %c0_i32 = arith.constant 0 : i32
    %12 = arith.cmpi eq, %c16_i32, %c0_i32 : i32
    %c1_i32 = arith.constant 1 : i32
    %13 = arith.select %12, %c1_i32, %c16_i32 : i32
    %14 = vector.broadcast %13 : i32 to vector<16x128xi32>
    %15 = arith.remsi %11, %14 : vector<16x128xi32>
    %c0_i32_9 = arith.constant 0 : i32
    %16 = vector.broadcast %c0_i32_9 : i32 to vector<16x128xi32>
    %17 = arith.cmpi ne, %15, %16 : vector<16x128xi32>
    %c0_i32_10 = arith.constant 0 : i32
    %18 = vector.broadcast %c0_i32_10 : i32 to vector<16x128xi32>
    %19 = arith.cmpi slt, %15, %18 : vector<16x128xi32>
    %c0_i32_11 = arith.constant 0 : i32
    %20 = arith.cmpi slt, %13, %c0_i32_11 : i32
    %21 = vector.broadcast %20 : i1 to vector<16x128xi1>
    %22 = vector.broadcast %21 : vector<16x128xi1> to vector<16x128xi1>
    %23 = arith.xori %19, %22 : vector<16x128xi1>
    %24 = arith.andi %23, %17 : vector<16x128xi1>
    %25 = vector.broadcast %13 : i32 to vector<16x128xi32>
    %26 = arith.addi %15, %25 : vector<16x128xi32>
    %27 = arith.select %24, %26, %15 : vector<16x128xi1>, vector<16x128xi32>
    %28 = tpu.iota {dimensions = array<i32: 1>} : vector<16x128xi32>
    %c64_i32 = arith.constant 64 : i32
    %c0_i32_12 = arith.constant 0 : i32
    %29 = arith.cmpi eq, %c64_i32, %c0_i32_12 : i32
    %c1_i32_13 = arith.constant 1 : i32
    %30 = arith.select %29, %c1_i32_13, %c64_i32 : i32
    %31 = vector.broadcast %30 : i32 to vector<16x128xi32>
    %32 = arith.remsi %28, %31 : vector<16x128xi32>
    %c0_i32_14 = arith.constant 0 : i32
    %33 = vector.broadcast %c0_i32_14 : i32 to vector<16x128xi32>
    %34 = arith.cmpi ne, %32, %33 : vector<16x128xi32>
    %c0_i32_15 = arith.constant 0 : i32
    %35 = vector.broadcast %c0_i32_15 : i32 to vector<16x128xi32>
    %36 = arith.cmpi slt, %32, %35 : vector<16x128xi32>
    %c0_i32_16 = arith.constant 0 : i32
    %37 = arith.cmpi slt, %30, %c0_i32_16 : i32
    %38 = vector.broadcast %37 : i1 to vector<16x128xi1>
    %39 = vector.broadcast %38 : vector<16x128xi1> to vector<16x128xi1>
    %40 = arith.xori %36, %39 : vector<16x128xi1>
    %41 = arith.andi %40, %34 : vector<16x128xi1>
    %42 = vector.broadcast %30 : i32 to vector<16x128xi32>
    %43 = arith.addi %32, %42 : vector<16x128xi32>
    %44 = arith.select %41, %43, %32 : vector<16x128xi1>, vector<16x128xi32>
    %c1_i32_17 = arith.constant 1 : i32
    %45 = vector.broadcast %c1_i32_17 : i32 to vector<16x128xi32>
    %46 = arith.cmpi sge, %27, %45 : vector<16x128xi32>
    %c15_i32 = arith.constant 15 : i32
    %47 = vector.broadcast %c15_i32 : i32 to vector<16x128xi32>
    %48 = arith.cmpi slt, %27, %47 : vector<16x128xi32>
    %c4_i32 = arith.constant 4 : i32
    %49 = vector.broadcast %c4_i32 : i32 to vector<16x128xi32>
    %50 = arith.cmpi sge, %44, %49 : vector<16x128xi32>
    %c60_i32 = arith.constant 60 : i32
    %51 = vector.broadcast %c60_i32 : i32 to vector<16x128xi32>
    %52 = arith.cmpi slt, %44, %51 : vector<16x128xi32>
    %c0_18 = arith.constant 0 : index
    %c0_19 = arith.constant 0 : index
    %53 = vector.load %arg1[%c0_18, %c0_19] : memref<16x128xf32, #tpu.memory_space<vmem>>, vector<16x128xf32>
    %cst = arith.constant 0.000000e+00 : f32
    %54 = vector.broadcast %cst : f32 to vector<16x128xf32>
    %c1_i32_20 = arith.constant 1 : i32
    %55 = tpu.dynamic_rotate %53 by %c1_i32_20 dim 0 : vector<16x128xf32>, i32 -> vector<16x128xf32>
    %cst_21 = arith.constant 0.000000e+00 : f32
    %56 = vector.broadcast %cst_21 : f32 to vector<16x128xf32>
    %57 = arith.select %46, %55, %56 : vector<16x128xi1>, vector<16x128xf32>
    %c4_i32_22 = arith.constant 4 : i32
    %58 = tpu.dynamic_rotate %57 by %c4_i32_22 dim 1 : vector<16x128xf32>, i32 -> vector<16x128xf32>
    %cst_23 = arith.constant 0.000000e+00 : f32
    %59 = vector.broadcast %cst_23 : f32 to vector<16x128xf32>
    %60 = arith.select %50, %58, %59 : vector<16x128xi1>, vector<16x128xf32>
    %61 = vector.extract_strided_slice %5 {offsets = [0, 0, 0], sizes = [1, 1, 128], strides = [1, 1, 1]} : vector<3x3x128xf32> to vector<1x1x128xf32>
    %62 = vector.shape_cast %61 : vector<1x1x128xf32> to vector<128xf32>
    %63 = vector.shape_cast %62 : vector<128xf32> to vector<1x128xf32>
    %64 = vector.broadcast %63 : vector<1x128xf32> to vector<16x128xf32>
    %65 = arith.mulf %60, %64 : vector<16x128xf32>
    %66 = arith.addf %54, %65 : vector<16x128xf32>
    %67 = vector.extract_strided_slice %5 {offsets = [0, 1, 0], sizes = [1, 1, 128], strides = [1, 1, 1]} : vector<3x3x128xf32> to vector<1x1x128xf32>
    %68 = vector.shape_cast %67 : vector<1x1x128xf32> to vector<128xf32>
    %69 = vector.shape_cast %68 : vector<128xf32> to vector<1x128xf32>
    %70 = vector.broadcast %69 : vector<1x128xf32> to vector<16x128xf32>
    %71 = arith.mulf %57, %70 : vector<16x128xf32>
    %72 = arith.addf %66, %71 : vector<16x128xf32>
    %c124_i32 = arith.constant 124 : i32
    %73 = tpu.dynamic_rotate %57 by %c124_i32 dim 1 : vector<16x128xf32>, i32 -> vector<16x128xf32>
    %cst_24 = arith.constant 0.000000e+00 : f32
    %74 = vector.broadcast %cst_24 : f32 to vector<16x128xf32>
    %75 = arith.select %52, %73, %74 : vector<16x128xi1>, vector<16x128xf32>
    %76 = vector.extract_strided_slice %5 {offsets = [0, 2, 0], sizes = [1, 1, 128], strides = [1, 1, 1]} : vector<3x3x128xf32> to vector<1x1x128xf32>
    %77 = vector.shape_cast %76 : vector<1x1x128xf32> to vector<128xf32>
    %78 = vector.shape_cast %77 : vector<128xf32> to vector<1x128xf32>
    %79 = vector.broadcast %78 : vector<1x128xf32> to vector<16x128xf32>
    %80 = arith.mulf %75, %79 : vector<16x128xf32>
    %81 = arith.addf %72, %80 : vector<16x128xf32>
    %c4_i32_25 = arith.constant 4 : i32
    %82 = tpu.dynamic_rotate %53 by %c4_i32_25 dim 1 : vector<16x128xf32>, i32 -> vector<16x128xf32>
    %cst_26 = arith.constant 0.000000e+00 : f32
    %83 = vector.broadcast %cst_26 : f32 to vector<16x128xf32>
    %84 = arith.select %50, %82, %83 : vector<16x128xi1>, vector<16x128xf32>
    %85 = vector.extract_strided_slice %5 {offsets = [1, 0, 0], sizes = [1, 1, 128], strides = [1, 1, 1]} : vector<3x3x128xf32> to vector<1x1x128xf32>
    %86 = vector.shape_cast %85 : vector<1x1x128xf32> to vector<128xf32>
    %87 = vector.shape_cast %86 : vector<128xf32> to vector<1x128xf32>
    %88 = vector.broadcast %87 : vector<1x128xf32> to vector<16x128xf32>
    %89 = arith.mulf %84, %88 : vector<16x128xf32>
    %90 = arith.addf %81, %89 : vector<16x128xf32>
    %91 = vector.extract_strided_slice %5 {offsets = [1, 1, 0], sizes = [1, 1, 128], strides = [1, 1, 1]} : vector<3x3x128xf32> to vector<1x1x128xf32>
    %92 = vector.shape_cast %91 : vector<1x1x128xf32> to vector<128xf32>
    %93 = vector.shape_cast %92 : vector<128xf32> to vector<1x128xf32>
    %94 = vector.broadcast %93 : vector<1x128xf32> to vector<16x128xf32>
    %95 = arith.mulf %53, %94 : vector<16x128xf32>
    %96 = arith.addf %90, %95 : vector<16x128xf32>
    %c124_i32_27 = arith.constant 124 : i32
    %97 = tpu.dynamic_rotate %53 by %c124_i32_27 dim 1 : vector<16x128xf32>, i32 -> vector<16x128xf32>
    %cst_28 = arith.constant 0.000000e+00 : f32
    %98 = vector.broadcast %cst_28 : f32 to vector<16x128xf32>
    %99 = arith.select %52, %97, %98 : vector<16x128xi1>, vector<16x128xf32>
    %100 = vector.extract_strided_slice %5 {offsets = [1, 2, 0], sizes = [1, 1, 128], strides = [1, 1, 1]} : vector<3x3x128xf32> to vector<1x1x128xf32>
    %101 = vector.shape_cast %100 : vector<1x1x128xf32> to vector<128xf32>
    %102 = vector.shape_cast %101 : vector<128xf32> to vector<1x128xf32>
    %103 = vector.broadcast %102 : vector<1x128xf32> to vector<16x128xf32>
    %104 = arith.mulf %99, %103 : vector<16x128xf32>
    %105 = arith.addf %96, %104 : vector<16x128xf32>
    %c15_i32_29 = arith.constant 15 : i32
    %106 = tpu.dynamic_rotate %53 by %c15_i32_29 dim 0 : vector<16x128xf32>, i32 -> vector<16x128xf32>
    %cst_30 = arith.constant 0.000000e+00 : f32
    %107 = vector.broadcast %cst_30 : f32 to vector<16x128xf32>
    %108 = arith.select %48, %106, %107 : vector<16x128xi1>, vector<16x128xf32>
    %c4_i32_31 = arith.constant 4 : i32
    %109 = tpu.dynamic_rotate %108 by %c4_i32_31 dim 1 : vector<16x128xf32>, i32 -> vector<16x128xf32>
    %cst_32 = arith.constant 0.000000e+00 : f32
    %110 = vector.broadcast %cst_32 : f32 to vector<16x128xf32>
    %111 = arith.select %50, %109, %110 : vector<16x128xi1>, vector<16x128xf32>
    %112 = vector.extract_strided_slice %5 {offsets = [2, 0, 0], sizes = [1, 1, 128], strides = [1, 1, 1]} : vector<3x3x128xf32> to vector<1x1x128xf32>
    %113 = vector.shape_cast %112 : vector<1x1x128xf32> to vector<128xf32>
    %114 = vector.shape_cast %113 : vector<128xf32> to vector<1x128xf32>
    %115 = vector.broadcast %114 : vector<1x128xf32> to vector<16x128xf32>
    %116 = arith.mulf %111, %115 : vector<16x128xf32>
    %117 = arith.addf %105, %116 : vector<16x128xf32>
    %118 = vector.extract_strided_slice %5 {offsets = [2, 1, 0], sizes = [1, 1, 128], strides = [1, 1, 1]} : vector<3x3x128xf32> to vector<1x1x128xf32>
    %119 = vector.shape_cast %118 : vector<1x1x128xf32> to vector<128xf32>
    %120 = vector.shape_cast %119 : vector<128xf32> to vector<1x128xf32>
    %121 = vector.broadcast %120 : vector<1x128xf32> to vector<16x128xf32>
    %122 = arith.mulf %108, %121 : vector<16x128xf32>
    %123 = arith.addf %117, %122 : vector<16x128xf32>
    %c124_i32_33 = arith.constant 124 : i32
    %124 = tpu.dynamic_rotate %108 by %c124_i32_33 dim 1 : vector<16x128xf32>, i32 -> vector<16x128xf32>
    %cst_34 = arith.constant 0.000000e+00 : f32
    %125 = vector.broadcast %cst_34 : f32 to vector<16x128xf32>
    %126 = arith.select %52, %124, %125 : vector<16x128xi1>, vector<16x128xf32>
    %127 = vector.extract_strided_slice %5 {offsets = [2, 2, 0], sizes = [1, 1, 128], strides = [1, 1, 1]} : vector<3x3x128xf32> to vector<1x1x128xf32>
    %128 = vector.shape_cast %127 : vector<1x1x128xf32> to vector<128xf32>
    %129 = vector.shape_cast %128 : vector<128xf32> to vector<1x128xf32>
    %130 = vector.broadcast %129 : vector<1x128xf32> to vector<16x128xf32>
    %131 = arith.mulf %126, %130 : vector<16x128xf32>
    %132 = arith.addf %123, %131 : vector<16x128xf32>
    %133 = vector.shape_cast %7 : vector<128xf32> to vector<1x128xf32>
    %134 = vector.broadcast %133 : vector<1x128xf32> to vector<16x128xf32>
    %135 = arith.addf %132, %134 : vector<16x128xf32>
    %cst_35 = arith.constant 0.000000e+00 : f32
    %136 = vector.broadcast %cst_35 : f32 to vector<16x128xf32>
    %137 = arith.maximumf %136, %135 : vector<16x128xf32>
    %138 = vector.broadcast %0 : f32 to vector<16x128xf32>
    %139 = arith.minimumf %138, %137 : vector<16x128xf32>
    %140 = vector.broadcast %1 : f32 to vector<16x128xf32>
    %141 = arith.mulf %139, %140 : vector<16x128xf32>
    %142 = math.roundeven %141 : vector<16x128xf32>
    %143 = arith.truncf %142 : vector<16x128xf32> to vector<16x128xbf16>
    %cst_36 = arith.constant dense<0.000000e+00> : vector<16x256xf32>
    %144 = tpu.matmul %143, %8, %cst_36 {dimension_numbers = #tpu.dot_dimension_numbers<[1], [0], [0], [1], [0, 0, 1, 1], [], []>} : vector<16x128xbf16>, vector<128x256xbf16>, vector<16x256xf32> -> vector<16x256xf32>
    %145 = vector.shape_cast %10 : vector<256xf32> to vector<1x256xf32>
    %146 = vector.broadcast %145 : vector<1x256xf32> to vector<16x256xf32>
    %147 = arith.addf %144, %146 : vector<16x256xf32>
    %cst_37 = arith.constant 0.000000e+00 : f32
    %148 = vector.broadcast %cst_37 : f32 to vector<16x256xf32>
    %149 = arith.maximumf %148, %147 : vector<16x256xf32>
    %150 = vector.broadcast %2 : f32 to vector<16x256xf32>
    %151 = arith.minimumf %150, %149 : vector<16x256xf32>
    %152 = vector.broadcast %3 : f32 to vector<16x256xf32>
    %153 = arith.mulf %151, %152 : vector<16x256xf32>
    %154 = math.roundeven %153 : vector<16x256xf32>
    %155 = vector.broadcast %4 : f32 to vector<16x256xf32>
    %156 = arith.mulf %154, %155 : vector<16x256xf32>
    %157 = arith.truncf %156 : vector<16x256xf32> to vector<16x256xbf16>
    %c0_38 = arith.constant 0 : index
    %c0_39 = arith.constant 0 : index
    %158 = vector.load %arg7[%c0_38, %c0_39] : memref<16x256xbf16, #tpu.memory_space<vmem>>, vector<16x256xbf16>
    tpu.vector_store %arg7[%c0_38, %c0_39], %157 {strides = array<i32>} : memref<16x256xbf16, #tpu.memory_space<vmem>>, vector<16x256xbf16>,
    return
  }
  func.func @transform_0(%arg0: i32) -> (i32, i32) {
    %c0_i32 = arith.constant 0 : i32
    %c0_i32_0 = arith.constant 0 : i32
    return %arg0, %c0_i32 : i32, i32
  }
  func.func @transform_1(%arg0: i32) -> (i32, i32, i32) {
    %c0_i32 = arith.constant 0 : i32
    %c0_i32_0 = arith.constant 0 : i32
    %c0_i32_1 = arith.constant 0 : i32
    %c0_i32_2 = arith.constant 0 : i32
    return %c0_i32, %c0_i32_0, %c0_i32_1 : i32, i32, i32
  }
  func.func @transform_2(%arg0: i32) -> (i32, i32) {
    %c0_i32 = arith.constant 0 : i32
    %c0_i32_0 = arith.constant 0 : i32
    %c0_i32_1 = arith.constant 0 : i32
    return %c0_i32, %c0_i32_0 : i32, i32
  }
  func.func @transform_3(%arg0: i32) -> (i32, i32) {
    %c0_i32 = arith.constant 0 : i32
    %c0_i32_0 = arith.constant 0 : i32
    %c0_i32_1 = arith.constant 0 : i32
    return %c0_i32, %c0_i32_0 : i32, i32
  }
  func.func @transform_4(%arg0: i32) -> (i32, i32) {
    %c0_i32 = arith.constant 0 : i32
    %c0_i32_0 = arith.constant 0 : i32
    %c0_i32_1 = arith.constant 0 : i32
    return %c0_i32, %c0_i32_0 : i32, i32
  }
  func.func @transform_5(%arg0: i32) -> i32 {
    %c0_i32 = arith.constant 0 : i32
    %c0_i32_0 = arith.constant 0 : i32
    return %c0_i32 : i32
  }
  func.func @transform_6(%arg0: i32) -> (i32, i32) {
    %c0_i32 = arith.constant 0 : i32
    %c0_i32_0 = arith.constant 0 : i32
    return %arg0, %c0_i32 : i32, i32
  }
}

</mosaic_0001>

<llo_original>
// kernel: tpu_custom_call.1
$region0: #{tpu_custom_call.1}
  #allocation0 [shape = 'u32[]', space=smem, size = 0x4, offset = 0x4, fixed_abs, tag = 'smem constant byte address 0x4 - core index']
  #allocation1 [shape = 'u32[144,128]{1,0:T(1,128)}', space=vmem, size = 0x12000, scoped, tag = 'internal scratch']
  %s0 = inlined_call_operand.hbm [shape: f32[16,128], index: 0, kind: input, shape index: {}]
  %s1 = inlined_call_operand.hbm [shape: f32[3,3,128], index: 1, kind: input, shape index: {}]
  %s2 = inlined_call_operand.vmem [shape: f32[1,128], index: 2, kind: input, shape index: {}]
  %s3 = inlined_call_operand.hbm [shape: bf16[128,256], index: 3, kind: input, shape index: {}]
  %s4 = inlined_call_operand.vmem [shape: f32[1,256], index: 4, kind: input, shape index: {}]
  %s5 = inlined_call_operand.vmem [shape: f32[5], index: 5, kind: input, shape index: {}]
  %s6 = inlined_call_operand.hbm [shape: bf16[16,256], index: 6, kind: output, shape index: {}]
  %s7 = sld [smem:[#allocation0]]
  $region50: #{tpu_custom_call.1} parent=0
    _
  %s9 = ssub.s32 1, %s7
  %s10 = scalar_select 0, %s9, %s7
  $region1: #{tpu_custom_call.1} parent=0
    #allocation2 [shape = 'u8[8192]{0}', space=vmem, size = 0x2000, scoped, tag = 'input window, operand 0, single buffered']
    #allocation3 [shape = 's32[1]{0}', space=sflag, size = 0x4, scoped, tag = 'scoped memory for tpu_custom_call.1']
    #allocation4 [shape = 's32[1]{0}', space=sflag, size = 0x4, scoped, tag = 'scoped memory for tpu_custom_call.1']
    #allocation5 [shape = 's32[1]{0}', space=sflag, size = 0x4, scoped, tag = 'scoped memory for tpu_custom_call.1']
    #allocation6 [shape = 'u8[6144]{0}', space=vmem, size = 0x1800, scoped, tag = 'input window, operand 1, single buffered']
    #allocation7 [shape = 's32[1]{0}', space=sflag, size = 0x4, scoped, tag = 'scoped memory for tpu_custom_call.1']
    #allocation8 [shape = 'u8[65536]{0}', space=vmem, size = 0x10000, scoped, tag = 'input window, operand 3, single buffered']
    #allocation9 [shape = 'u8[512]{0}', space=smem, size = 0x200, scoped, tag = 'input window, operand 5, single buffered']
    #allocation10 [shape = 'u8[8192]{0}', space=vmem, size = 0x2000, scoped, tag = 'output window, operand 0, single buffered']
    %11 = vsyncpa [#allocation3], 0
    %12 = vsyncpa [#allocation7], 0
    %13 = vsyncpa [#allocation5], 0
    %14 = vsyncpa [#allocation4], 0
    // Predicated region
    $region2: #{tpu_custom_call.1} parent=1 // pred_check
      _
    $region3: #{tpu_custom_call.1} parent=1 // pred_check_branch
      %16 = sbr.rel (0) target = $region5
    $region4: #{tpu_custom_call.1} parent=1 // pred_region
      %s18 = ssub.s32 256, 256
      %19 = vsyncadd [#allocation3], %s18
      %s20 = sshll.u32 [#allocation2], 4
      %s21 = int_to_ptr.vmem [resolvable:$true] %s20
      %26 = dma.hbm_to_vmem [thread:$0]  %s0, 256, %s21, [#allocation3], 128, 128, 8
    $region5: #{tpu_custom_call.1} parent=1 // pred_fallthru
      _
    // Predicated region
    $region6: #{tpu_custom_call.1} parent=1 // pred_check
      _
    $region7: #{tpu_custom_call.1} parent=1 // pred_check_branch
      %28 = sbr.rel (0) target = $region9
    $region8: #{tpu_custom_call.1} parent=1 // pred_region
      %s30 = ssub.s32 192, 192
      %31 = vsyncadd [#allocation7], %s30
      %s32 = sshll.u32 [#allocation6], 4
      %s33 = int_to_ptr.vmem [resolvable:$true] %s32
      %38 = dma.hbm_to_vmem [thread:$0]  %s1, 192, %s33, [#allocation7], 64, 64, 4
    $region9: #{tpu_custom_call.1} parent=1 // pred_fallthru
      _
    // Predicated region
    $region10: #{tpu_custom_call.1} parent=1 // pred_check
      _
    $region11: #{tpu_custom_call.1} parent=1 // pred_check_branch
      %40 = sbr.rel (0) target = $region13
    $region12: #{tpu_custom_call.1} parent=1 // pred_region
      _
    $region13: #{tpu_custom_call.1} parent=1 // pred_fallthru
      _
    // Predicated region
    $region14: #{tpu_custom_call.1} parent=1 // pred_check
      _
    $region15: #{tpu_custom_call.1} parent=1 // pred_check_branch
      %42 = sbr.rel (0) target = $region17
    $region16: #{tpu_custom_call.1} parent=1 // pred_region
      %s44 = ssub.s32 2048, 2048
      %45 = vsyncadd [#allocation7], %s44
      %s46 = sshll.u32 [#allocation8], 4
      %s47 = int_to_ptr.vmem [resolvable:$true] %s46
      %52 = dma.hbm_to_vmem [thread:$0]  %s3, 2048, %s47, [#allocation7], 128, 128, 8
    $region17: #{tpu_custom_call.1} parent=1 // pred_fallthru
      _
    // Predicated region
    $region18: #{tpu_custom_call.1} parent=1 // pred_check
      _
    $region19: #{tpu_custom_call.1} parent=1 // pred_check_branch
      %54 = sbr.rel (0) target = $region21
    $region20: #{tpu_custom_call.1} parent=1 // pred_region
      _
    $region21: #{tpu_custom_call.1} parent=1 // pred_fallthru
      _
    // Predicated region
    $region22: #{tpu_custom_call.1} parent=1 // pred_check
      _
    $region23: #{tpu_custom_call.1} parent=1 // pred_check_branch
      %56 = sbr.rel (0) target = $region25
    $region24: #{tpu_custom_call.1} parent=1 // pred_region
      %s58 = ssub.s32 16, 16
      %59 = vsyncadd [#allocation5], %s58
      %s61 = sshll.u32 %s5, 4
      %s62 = int_to_ptr.vmem [resolvable:$true] %s61
      %64 = dma.vmem_to_smem %s62, 16, [#allocation9], [#allocation5]
    $region25: #{tpu_custom_call.1} parent=1 // pred_fallthru
      _
    // Predicated region
    $region26: #{tpu_custom_call.1} parent=1 // pred_check
      _
    $region27: #{tpu_custom_call.1} parent=1 // pred_check_branch
      %66 = sbr.rel (0) target = $region29
    $region28: #{tpu_custom_call.1} parent=1 // pred_region
      %67 = dma.done [#allocation3], 256
    $region29: #{tpu_custom_call.1} parent=1 // pred_fallthru
      _
    // Predicated region
    $region30: #{tpu_custom_call.1} parent=1 // pred_check
      _
    $region31: #{tpu_custom_call.1} parent=1 // pred_check_branch
      %69 = sbr.rel (0) target = $region33
    $region32: #{tpu_custom_call.1} parent=1 // pred_region
      %70 = dma.done [#allocation7], 192
    $region33: #{tpu_custom_call.1} parent=1 // pred_fallthru
      _
    // Predicated region
    $region34: #{tpu_custom_call.1} parent=1 // pred_check
      _
    $region35: #{tpu_custom_call.1} parent=1 // pred_check_branch
      %72 = sbr.rel (0) target = $region37
    $region36: #{tpu_custom_call.1} parent=1 // pred_region
      %73 = dma.done [#allocation7], 2048
    $region37: #{tpu_custom_call.1} parent=1 // pred_fallthru
      _
    // Predicated region
    $region38: #{tpu_custom_call.1} parent=1 // pred_check
      _
    $region39: #{tpu_custom_call.1} parent=1 // pred_check_branch
      %75 = sbr.rel (0) target = $region41
    $region40: #{tpu_custom_call.1} parent=1 // pred_region
      %76 = dma.done [#allocation5], 16
    $region41: #{tpu_custom_call.1} parent=1 // pred_fallthru
      _
    %77 = sfence
    %s79 = sld [smem:[#allocation9]]
    %s80 = sld [smem:[#allocation9 + $0x1]]
    %s81 = sld [smem:[#allocation9 + $0x2]]
    %s82 = sld [smem:[#allocation9 + $0x3]]
    %s83 = sld [smem:[#allocation9 + $0x4]]
    %v84 = vld [vmem:[#allocation6] sm:$0x7]
    %v85 = vld [vmem:[#allocation6 + $0x4] sm:$0x7]
    %v86 = vld [vmem:[#allocation6 + $0x8] sm:$0x7]
    %v87 = vld [vmem:[%s2] sm:$0x1]
    %v88 = vld [vmem:[#allocation8] sm:$0xff]
    %v89 = vld [vmem:[#allocation8 + $0x8] sm:$0xff]
    %v90 = vld [vmem:[#allocation8 + $0x10] sm:$0xff]
    %v91 = vld [vmem:[#allocation8 + $0x18] sm:$0xff]
    %v92 = vld [vmem:[#allocation8 + $0x20] sm:$0xff]
    %v93 = vld [vmem:[#allocation8 + $0x28] sm:$0xff]
    %v94 = vld [vmem:[#allocation8 + $0x30] sm:$0xff]
    %v95 = vld [vmem:[#allocation8 + $0x38] sm:$0xff]
    %v96 = vld [vmem:[#allocation8 + $0x40] sm:$0xff]
    %v97 = vld [vmem:[#allocation8 + $0x48] sm:$0xff]
    %v98 = vld [vmem:[#allocation8 + $0x50] sm:$0xff]
    %v99 = vld [vmem:[#allocation8 + $0x58] sm:$0xff]
    %v100 = vld [vmem:[#allocation8 + $0x60] sm:$0xff]
    %v101 = vld [vmem:[#allocation8 + $0x68] sm:$0xff]
    %v102 = vld [vmem:[#allocation8 + $0x70] sm:$0xff]
    %v103 = vld [vmem:[#allocation8 + $0x78] sm:$0xff]
    %v104 = vld [vmem:[%s4] sm:$0x3]
    %v105 = vlaneseq
    %v106 = vshrl.u32 %v105, 7
    %v107 = vadd.s32 %v106, 8
    %vm108 = vcmp.lt.s32.totalorder %v106, 0
    %v109 = vsub.s32 0, %v106
    %v110 = vsel %vm108, %v109, %v106
    %v111 = vshrl.u32 %v110, 4
    %v112 = vand.u32 %v110, 15
    %v113 = vsub.s32 0, %v112
    %v114 = vsel %vm108, %v113, %v112
    %vm115 = vcmp.lt.s32.totalorder %v107, 0
    %v116 = vsub.s32 0, %v107
    %v117 = vsel %vm115, %v116, %v107
    %v118 = vshrl.u32 %v117, 4
    %v119 = vand.u32 %v117, 15
    %v120 = vsub.s32 0, %v119
    %v121 = vsel %vm115, %v120, %v119
    %vm122 = vcmp.ne.s32.totalorder %v114, 0
    %vm123 = vcmp.ne.s32.totalorder %v121, 0
    %vm124 = vcmp.lt.s32.totalorder %v114, 0
    %vm125 = vcmp.lt.s32.totalorder %v121, 0
    %vm126 = vmand %vm124, %vm122
    %vm127 = vmand %vm125, %vm123
    %v128 = vadd.s32 %v114, 16
    %v129 = vadd.s32 %v121, 16
    %v130 = vsel %vm126, %v128, %v114
    %v131 = vsel %vm127, %v129, %v121
    %v132 = vlaneseq
    %v133 = vand.u32 %v132, 127
    %vm134 = vcmp.lt.s32.totalorder %v133, 0
    %v135 = vsub.s32 0, %v133
    %v136 = vsel %vm134, %v135, %v133
    %v137 = vshrl.u32 %v136, 6
    %v138 = vand.u32 %v136, 63
    %v139 = vsub.s32 0, %v138
    %v140 = vsel %vm134, %v139, %v138
    %vm141 = vcmp.ne.s32.totalorder %v140, 0
    %vm142 = vcmp.lt.s32.totalorder %v140, 0
    %vm143 = vmand %vm142, %vm141
    %v144 = vadd.s32 %v140, 64
    %v145 = vsel %vm143, %v144, %v140
    %vm146 = vcmp.ge.s32.totalorder %v130, 1
    %vm147 = vcmp.ge.s32.totalorder %v131, 1
    %vm148 = vcmp.lt.s32.totalorder %v130, 15
    %vm149 = vcmp.lt.s32.totalorder %v131, 15
    %vm150 = vcmp.ge.s32.totalorder %v145, 4
    %vm151 = vcmp.lt.s32.totalorder %v145, 60
    %v152 = vld [vmem:[#allocation2] sm:$0xff]
    %v153 = vld [vmem:[#allocation2 + $0x8] sm:$0xff]
    %v154 = vrot.slane %v152, 7
    %v155 = vrot.slane %v153, 7
    %vm156 = vcmp.lt.s32.totalorder %v106, 1
    %v157 = vsel %vm156, %v154, %v155
    %v158 = vsel %vm156, %v155, %v154
    %v159 = vsel %vm146, %v158, 0.0
    %v160 = vsel %vm147, %v157, 0.0
    %161 = vrot.lane.b32.xlu0 %v159, 4
    %v162 = vpop.permute.xlu0 %161
    %163 = vrot.lane.b32.xlu0 %v160, 4
    %v164 = vpop.permute.xlu0 %163
    %v165 = vsel %vm150, %v162, 0.0
    %v166 = vsel %vm150, %v164, 0.0
    %v167 = vlaneseq
    %v168 = vshrl.u32 %v167, 7
    %v169 = vsub.s32 0, %v168
    %v170 = vrot.slane %v84, %v169
    %v171 = vmul.f32 %v165, %v170
    %v172 = vmul.f32 %v166, %v170
    %v173 = vadd.f32 %v171, 0.0
    %v174 = vadd.f32 %v172, 0.0
    %v175 = vlaneseq
    %v176 = vshrl.u32 %v175, 7
    %v177 = vsub.s32 1, %v176
    %v178 = vrot.slane %v84, %v177
    %v179 = vmul.f32 %v159, %v178
    %v180 = vmul.f32 %v160, %v178
    %v181 = vadd.f32 %v173, %v179
    %v182 = vadd.f32 %v174, %v180
    %183 = vrot.lane.b32.xlu0 %v159, 124
    %v184 = vpop.permute.xlu0 %183
    %185 = vrot.lane.b32.xlu0 %v160, 124
    %v186 = vpop.permute.xlu0 %185
    %v187 = vsel %vm151, %v184, 0.0
    %v188 = vsel %vm151, %v186, 0.0
    %v189 = vlaneseq
    %v190 = vshrl.u32 %v189, 7
    %v191 = vsub.s32 2, %v190
    %v192 = vrot.slane %v84, %v191
    %v193 = vmul.f32 %v187, %v192
    %v194 = vmul.f32 %v188, %v192
    %v195 = vadd.f32 %v181, %v193
    %v196 = vadd.f32 %v182, %v194
    %197 = vrot.lane.b32.xlu0 %v152, 4
    %v198 = vpop.permute.xlu0 %197
    %199 = vrot.lane.b32.xlu0 %v153, 4
    %v200 = vpop.permute.xlu0 %199
    %v201 = vsel %vm150, %v198, 0.0
    %v202 = vsel %vm150, %v200, 0.0
    %v203 = vlaneseq
    %v204 = vshrl.u32 %v203, 7
    %v205 = vsub.s32 0, %v204
    %v206 = vrot.slane %v85, %v205
    %v207 = vmul.f32 %v201, %v206
    %v208 = vmul.f32 %v202, %v206
    %v209 = vadd.f32 %v195, %v207
    %v210 = vadd.f32 %v196, %v208
    %v211 = vlaneseq
    %v212 = vshrl.u32 %v211, 7
    %v213 = vsub.s32 1, %v212
    %v214 = vrot.slane %v85, %v213
    %v215 = vmul.f32 %v152, %v214
    %v216 = vmul.f32 %v153, %v214
    %v217 = vadd.f32 %v209, %v215
    %v218 = vadd.f32 %v210, %v216
    %219 = vrot.lane.b32.xlu0 %v152, 124
    %v220 = vpop.permute.xlu0 %219
    %221 = vrot.lane.b32.xlu0 %v153, 124
    %v222 = vpop.permute.xlu0 %221
    %v223 = vsel %vm151, %v220, 0.0
    %v224 = vsel %vm151, %v222, 0.0
    %v225 = vlaneseq
    %v226 = vshrl.u32 %v225, 7
    %v227 = vsub.s32 2, %v226
    %v228 = vrot.slane %v85, %v227
    %v229 = vmul.f32 %v223, %v228
    %v230 = vmul.f32 %v224, %v228
    %v231 = vadd.f32 %v217, %v229
    %v232 = vadd.f32 %v218, %v230
    %v233 = vrot.slane %v152, 1
    %v234 = vrot.slane %v153, 1
    %vm235 = vcmp.lt.s32.totalorder %v106, 7
    %v236 = vsel %vm235, %v233, %v234
    %v237 = vsel %vm235, %v234, %v233
    %v238 = vsel %vm148, %v236, 0.0
    %v239 = vsel %vm149, %v237, 0.0
    %240 = vrot.lane.b32.xlu0 %v238, 4
    %v241 = vpop.permute.xlu0 %240
    %242 = vrot.lane.b32.xlu0 %v239, 4
    %v243 = vpop.permute.xlu0 %242
    %v244 = vsel %vm150, %v241, 0.0
    %v245 = vsel %vm150, %v243, 0.0
    %v246 = vlaneseq
    %v247 = vshrl.u32 %v246, 7
    %v248 = vsub.s32 0, %v247
    %v249 = vrot.slane %v86, %v248
    %v250 = vmul.f32 %v244, %v249
    %v251 = vmul.f32 %v245, %v249
    %v252 = vadd.f32 %v231, %v250
    %v253 = vadd.f32 %v232, %v251
    %v254 = vlaneseq
    %v255 = vshrl.u32 %v254, 7
    %v256 = vsub.s32 1, %v255
    %v257 = vrot.slane %v86, %v256
    %v258 = vmul.f32 %v238, %v257
    %v259 = vmul.f32 %v239, %v257
    %v260 = vadd.f32 %v252, %v258
    %v261 = vadd.f32 %v253, %v259
    %262 = vrot.lane.b32.xlu0 %v238, 124
    %v263 = vpop.permute.xlu0 %262
    %264 = vrot.lane.b32.xlu0 %v239, 124
    %v265 = vpop.permute.xlu0 %264
    %v266 = vsel %vm151, %v263, 0.0
    %v267 = vsel %vm151, %v265, 0.0
    %v268 = vlaneseq
    %v269 = vshrl.u32 %v268, 7
    %v270 = vsub.s32 2, %v269
    %v271 = vrot.slane %v86, %v270
    %v272 = vmul.f32 %v266, %v271
    %v273 = vmul.f32 %v267, %v271
    %v274 = vadd.f32 %v260, %v272
    %v275 = vadd.f32 %v261, %v273
    %v277 = vlaneseq
    %v278 = vshrl.u32 %v277, 7
    %v279 = vsub.s32 0, %v278
    %v280 = vrot.slane %v87, %v279
    %v282 = vadd.f32 %v274, %v280
    %v283 = vadd.f32 %v275, %v280
    %v284 = vmax.f32 %v282, 0.0
    %v285 = vmax.f32 %v283, 0.0
    %v286 = vstv %s79
    %v287 = vmin.f32 %v286, %v284
    %v288 = vmin.f32 %v286, %v285
    %v289 = vstv %s80
    %v290 = vmul.f32 %v287, %v289
    %v291 = vmul.f32 %v288, %v289
    %v292 = vround.ne.pseudo %v290
    %v293 = vround.ne.pseudo %v291
    %v294 = vpack.c.bf16 %v293, %v292
    %v296 = vlaneseq
    %v297 = vshrl.u32 %v296, 7
    %v298 = vsub.s32 0, %v297
    %v299 = vrot.slane %v104, %v298
    %v300 = vlaneseq
    %v301 = vshrl.u32 %v300, 7
    %v302 = vsub.s32 1, %v301
    %v303 = vrot.slane %v104, %v302
    %v322 = vunpack.c.l.b16 %v88
    %v323 = vunpack.c.h.b16 %v88
    %v324 = vunpack.c.l.b16 %v89
    %v325 = vunpack.c.h.b16 %v89
    %v326 = vunpack.c.l.b16 %v90
    %v327 = vunpack.c.h.b16 %v90
    %v328 = vunpack.c.l.b16 %v91
    %v329 = vunpack.c.h.b16 %v91
    %v330 = vunpack.c.l.b16 %v92
    %v331 = vunpack.c.h.b16 %v92
    %v332 = vunpack.c.l.b16 %v93
    %v333 = vunpack.c.h.b16 %v93
    %v334 = vunpack.c.l.b16 %v94
    %v335 = vunpack.c.h.b16 %v94
    %v336 = vunpack.c.l.b16 %v95
    %v337 = vunpack.c.h.b16 %v95
    %v338 = vunpack.c.l.b16 %v96
    %v339 = vunpack.c.h.b16 %v96
    %v340 = vunpack.c.l.b16 %v97
    %v341 = vunpack.c.h.b16 %v97
    %v342 = vunpack.c.l.b16 %v98
    %v343 = vunpack.c.h.b16 %v98
    %v344 = vunpack.c.l.b16 %v99
    %v345 = vunpack.c.h.b16 %v99
    %v346 = vunpack.c.l.b16 %v100
    %v347 = vunpack.c.h.b16 %v100
    %v348 = vunpack.c.l.b16 %v101
    %v349 = vunpack.c.h.b16 %v101
    %v350 = vunpack.c.l.b16 %v102
    %v351 = vunpack.c.h.b16 %v102
    %v352 = vunpack.c.l.b16 %v103
    %v353 = vunpack.c.h.b16 %v103
    %v354 = vpack.c.b16 %v324, %v322
    %v355 = vpack.c.b16 %v325, %v323
    %v356 = vpack.c.b16 %v328, %v326
    %v357 = vpack.c.b16 %v329, %v327
    %v358 = vpack.c.b16 %v332, %v330
    %v359 = vpack.c.b16 %v333, %v331
    %v360 = vpack.c.b16 %v336, %v334
    %v361 = vpack.c.b16 %v337, %v335
    %v362 = vpack.c.b16 %v340, %v338
    %v363 = vpack.c.b16 %v341, %v339
    %v364 = vpack.c.b16 %v344, %v342
    %v365 = vpack.c.b16 %v345, %v343
    %v366 = vpack.c.b16 %v348, %v346
    %v367 = vpack.c.b16 %v349, %v347
    %v368 = vpack.c.b16 %v352, %v350
    %v369 = vpack.c.b16 %v353, %v351
    %386 = vmatprep.subr.bf16.mxu0 %v355
    %387 = vmatpush1.bf16.msra.mxu0 %v354
    %388 = vmatprep.subr.bf16.mxu0 %v357
    %389 = vmatpush1.bf16.msra.mxu0 %v356
    %390 = vmatprep.subr.bf16.mxu0 %v359
    %391 = vmatpush1.bf16.msra.mxu0 %v358
    %392 = vmatprep.subr.bf16.mxu0 %v361
    %393 = vmatpush1.bf16.msra.mxu0 %v360
    %394 = vmatprep.subr.bf16.mxu0 %v363
    %395 = vmatpush1.bf16.msra.mxu0 %v362
    %396 = vmatprep.subr.bf16.mxu0 %v365
    %397 = vmatpush1.bf16.msra.mxu0 %v364
    %398 = vmatprep.subr.bf16.mxu0 %v367
    %399 = vmatpush1.bf16.msra.mxu0 %v366
    %400 = vmatprep.subr.bf16.mxu0 %v369
    %401 = vmatpush1.bf16.msra.mxu0 %v368
    %402 = vmatprep.subr.bf16.mxu0 0
    %403 = vmatpush1.bf16.msra.mxu0 0
    %404 = vmatprep.subr.bf16.mxu0 0
    %405 = vmatpush1.bf16.msra.mxu0 0
    %406 = vmatprep.subr.bf16.mxu0 0
    %407 = vmatpush1.bf16.msra.mxu0 0
    %408 = vmatprep.subr.bf16.mxu0 0
    %409 = vmatpush1.bf16.msra.mxu0 0
    %410 = vmatprep.subr.bf16.mxu0 0
    %411 = vmatpush1.bf16.msra.mxu0 0
    %412 = vmatprep.subr.bf16.mxu0 0
    %413 = vmatpush1.bf16.msra.mxu0 0
    %414 = vmatprep.subr.bf16.mxu0 0
    %415 = vmatpush1.bf16.msra.mxu0 0
    %416 = vmatprep.subr.bf16.mxu0 0
    %417 = vmatpush1.bf16.msra.mxu0 0
    %418 = vmatprep.mubr.bf16.mxu0 0
    %419 = vmatmul.mubr.bf16.gmra.mrb[0].mxu0 %v294
    %v420 = vpop.f32.mrb[0].mxu0
    %v421 = vadd.f32 %v299, %v420
    %v422 = vpop.f32.mrb[0].mxu0
    %v423 = vadd.f32 %v303, %v422
    %v424 = vpop.f32.mrb[0].mxu0
    %v425 = vadd.f32 %v299, %v424
    %v426 = vpop.f32.mrb[0].mxu0
    %v427 = vadd.f32 %v303, %v426
    %428 = vdwg.mxu0
    %v429 = vmax.f32 %v421, 0.0
    %v430 = vmax.f32 %v423, 0.0
    %v431 = vmax.f32 %v425, 0.0
    %v432 = vmax.f32 %v427, 0.0
    %v433 = vstv %s81
    %v434 = vmin.f32 %v433, %v429
    %v435 = vmin.f32 %v433, %v430
    %v436 = vmin.f32 %v433, %v431
    %v437 = vmin.f32 %v433, %v432
    %v438 = vstv %s82
    %v439 = vmul.f32 %v434, %v438
    %v440 = vmul.f32 %v435, %v438
    %v441 = vmul.f32 %v436, %v438
    %v442 = vmul.f32 %v437, %v438
    %v443 = vround.ne.pseudo %v439
    %v444 = vround.ne.pseudo %v440
    %v445 = vround.ne.pseudo %v441
    %v446 = vround.ne.pseudo %v442
    %v447 = vstv %s83
    %v448 = vmul.f32 %v443, %v447
    %v449 = vmul.f32 %v444, %v447
    %v450 = vmul.f32 %v445, %v447
    %v451 = vmul.f32 %v446, %v447
    %v452 = vpack.c.bf16 %v450, %v448
    %v453 = vpack.c.bf16 %v451, %v449
    %v456 = vunpack.c.l.b16 %v452
    %v457 = vunpack.c.l.b16 %v453
    %v458 = vunpack.c.h.b16 %v452
    %v459 = vunpack.c.h.b16 %v453
    %v460 = vpack.c.b16 %v457, %v456
    %v461 = vpack.c.b16 %v459, %v458
    %464 = vst [vmem:[#allocation10] sm:$0xff] %v460
    %465 = vst [vmem:[#allocation10 + $0x8] sm:$0xff] %v461
    // Predicated region
    $region42: #{tpu_custom_call.1} parent=1 // pred_check
      _
    $region43: #{tpu_custom_call.1} parent=1 // pred_check_branch
      %467 = sbr.rel (0) target = $region45
    $region44: #{tpu_custom_call.1} parent=1 // pred_region
      %s469 = ssub.s32 256, 256
      %470 = vsyncadd [#allocation4], %s469
      %s471 = sshll.u32 [#allocation10], 4
      %s472 = int_to_ptr.vmem [resolvable:$true] %s471
      %477 = dma.vmem_to_hbm [thread:$0]  %s472, 256, %s6, [#allocation4], 128, 128, 8
    $region45: #{tpu_custom_call.1} parent=1 // pred_fallthru
      _
    // Predicated region
    $region46: #{tpu_custom_call.1} parent=1 // pred_check
      _
    $region47: #{tpu_custom_call.1} parent=1 // pred_check_branch
      %479 = sbr.rel (0) target = $region49
    $region48: #{tpu_custom_call.1} parent=1 // pred_region
      %480 = dma.done [#allocation4], 256
    $region49: #{tpu_custom_call.1} parent=1 // pred_fallthru
      _
    %481 = vsyncpa [#allocation3], 1
    %482 = vsyncpa [#allocation7], 1
    %483 = vsyncpa [#allocation4], 1
    %484 = vsyncpa [#allocation5], 1

</llo_original>
